<compile_context>
chip_gen: v6e
topology: v6e:2x2x1
jax: 0.10.0
libtpu: 0.0.40
codegen_flags: <defaults>
</compile_context>

<pallas_src>
import jax
import jax.numpy as jnp
from jax.experimental import pallas as pl
from jax.experimental.pallas import tpu as pltpu

# ---- module hyper-parameters (indim == outdim required by the residual add) ----
INDIM = 32
HIDDIM = 32
OUTDIM = 32
N_GRAPH = 2
H = N_GRAPH * 2               # 4 GCN heads
D_K = OUTDIM // H             # 8
HEADS_PER_GRAPH = 2           # head order [g0, g0, g1, g1]
GW = HEADS_PER_GRAPH * HIDDIM  # 64 : fused layer-1 output columns per unique graph
EPS = 1e-6

B = 2                         # batch
N = 8                         # node_num
BN = B * N


def graph_module_kernel(x_ref, adj_ref, w1_ref, w2_ref, b64_ref, b32_ref, out_ref):
    x = x_ref[...]                                     # [B*N, INDIM]
    adj0 = adj_ref[0]                                  # [B*N, B*N] block-diag (graph 0)
    adj1 = adj_ref[1]                                  # [B*N, B*N] block-diag (graph 1)

    # --- static, sublane-aligned views into the packed parameter slabs (no copies) ---
    w1_g0 = w1_ref[0:INDIM, :]                         # [32, 64]  heads 0,1
    w1_g1 = w1_ref[INDIM:2 * INDIM, :]                 # [32, 64]  heads 2,3
    w2_top = w2_ref[0:GW, :]                           # [64, 32]  nonzero only in cols 0:16
    w2_bot = w2_ref[GW:2 * GW, :]                      # [64, 32]  nonzero only in cols 16:32
    fw1 = w2_ref[2 * GW:2 * GW + INDIM, :]             # [32, 32]  FFN w_1
    fw2 = w2_ref[2 * GW + INDIM:2 * GW + 2 * INDIM, :]  # [32, 32]  FFN w_2

    b1_g0 = b64_ref[0:1, :]                            # [1, 64]
    b1_g1 = b64_ref[1:2, :]                            # [1, 64]
    b2 = b32_ref[0:1, :]                               # [1, 32]
    ln_a = b32_ref[1:2, :]                             # [1, 32]
    ln_b = b32_ref[2:3, :]                             # [1, 32]
    fb1 = b32_ref[3:4, :]                              # [1, 32]
    fb2 = b32_ref[4:5, :]                              # [1, 32]

    # ---- GCN layer 1, one fused matmul per unique graph (no lane slices / concats) ----
    h1a = jnp.maximum(
        jnp.dot(adj0, jnp.dot(x, w1_g0, preferred_element_type=jnp.float32),
                preferred_element_type=jnp.float32) + b1_g0, 0.0)           # [BN, 64]
    h1b = jnp.maximum(
        jnp.dot(adj1, jnp.dot(x, w1_g1, preferred_element_type=jnp.float32),
                preferred_element_type=jnp.float32) + b1_g1, 0.0)           # [BN, 64]

    # ---- GCN layer 2: additive combination; w2_top/w2_bot are zero outside their
    #      own head columns, so the sum IS the 4-head concatenation ----
    g = (jnp.dot(adj0, jnp.dot(h1a, w2_top, preferred_element_type=jnp.float32),
                 preferred_element_type=jnp.float32)
         + jnp.dot(adj1, jnp.dot(h1b, w2_bot, preferred_element_type=jnp.float32),
                   preferred_element_type=jnp.float32)
         + b2)                                                               # [BN, 32]

    # ---- LayerNorm (torch.std is unbiased, ddof=1; eps added to std) + residual ----
    mean = jnp.mean(g, axis=-1, keepdims=True)
    var = jnp.sum((g - mean) ** 2, axis=-1, keepdims=True) / (OUTDIM - 1)
    # exact reciprocal (approx=True would risk the 1e-4 fidelity bar)
    inv = pl.reciprocal(jnp.sqrt(var) + EPS)
    g_feat = ln_a * (g - mean) * inv + ln_b + x                              # [BN, 32]

    # ---- PositionwiseFeedForward + residual ----
    f1 = jnp.maximum(
        jnp.dot(g_feat, fw1, preferred_element_type=jnp.float32) + fb1, 0.0)
    out_ref[...] = jnp.dot(f1, fw2, preferred_element_type=jnp.float32) + fb2 + g_feat


def prepare_fused_params(params):
    """One-time weight fusion/packing (hoisted out of the per-call path)."""
    gw1, gb1, gw2, gb2, ln_a, ln_b, fw1, fb1, fw2, fb2 = params

    # layer-1: per unique graph, heads concatenated on the output axis, then
    # sublane-stacked into one [64, 64] slab.
    w1_g0 = jnp.concatenate([gw1[0], gw1[1]], axis=1)                 # [32, 64]
    w1_g1 = jnp.concatenate([gw1[2], gw1[3]], axis=1)                 # [32, 64]
    w1_slab = jnp.concatenate([w1_g0, w1_g1], axis=0)                  # [64, 64]

    # layer-2: block-diagonal [128, 32], split into its graph-0 / graph-1 row halves,
    # then FFN weights appended -> one [192, 32] slab.
    w2_bd = jax.scipy.linalg.block_diag(gw2[0], gw2[1], gw2[2], gw2[3])  # [128, 32]
    w2_slab = jnp.concatenate([w2_bd[:GW], w2_bd[GW:], fw1, fw2], axis=0)  # [192, 32]

    # bias / LayerNorm slabs
    b64 = jnp.stack([jnp.concatenate([gb1[0], gb1[1]]),
                     jnp.concatenate([gb1[2], gb1[3]])], axis=0)       # [2, 64]
    b32 = jnp.concatenate([gb2.reshape(1, OUTDIM), ln_a, ln_b, fb1, fb2], axis=0)  # [5, 32]

    return (jnp.asarray(w1_slab), jnp.asarray(w2_slab),
            jnp.asarray(b64), jnp.asarray(b32))


@jax.jit
def graph_module_forward(graph_nodes, graph, w1_slab, w2_slab, b64, b32):
    """graph_nodes: [B, N, INDIM] f32, graph: [B, N_GRAPH, N, N]."""
    b, n, _ = graph_nodes.shape
    ng = graph.shape[1]

    graph_f = graph.astype(jnp.float32)
    # Module return value: torch.stack([adj, adj], dim=2).view(B, -1, N, N) -> [g0,g0,g1,g1].
    # Pure XLA broadcast; never shipped to the kernel.
    adj4 = jnp.stack([graph_f, graph_f], axis=2).reshape(b, -1, n, n)

    # Block-diagonal batch fold per unique graph: [N_GRAPH, B*N, B*N].
    # Cheap pad/concat construction (no einsum with eye(B)).
    # TODO(synk): for large B switch to a [G,B,N,N] layout with a "parallel" grid axis
    # over batch (linear HBM traffic, v7x dual-TC use) instead of the quadratic fold.
    adj_bd = jnp.stack([
        jax.scipy.linalg.block_diag(*[graph_f[bb, g] for bb in range(b)])
        for g in range(ng)
    ], axis=0)

    x_flat = graph_nodes.reshape(b * n, INDIM).astype(jnp.float32)

    out = pl.pallas_call(
        graph_module_kernel,
        out_shape=jax.ShapeDtypeStruct((b * n, OUTDIM), jnp.float32),
        grid=(1,),                                               # whole batch in one step
        in_specs=[
            pl.BlockSpec((b * n, INDIM), lambda i: (0, 0)),          # x (batch-folded)
            pl.BlockSpec((ng, b * n, b * n), lambda i: (0, 0, 0)),   # block-diag adjacency
            pl.BlockSpec((2 * INDIM, GW), lambda i: (0, 0)),         # W1 slab [64,64]
            pl.BlockSpec((2 * GW + 2 * INDIM, OUTDIM), lambda i: (0, 0)),  # W2+FFN slab [192,32]
            pl.BlockSpec((2, GW), lambda i: (0, 0)),                 # layer-1 biases [2,64]
            pl.BlockSpec((5, OUTDIM), lambda i: (0, 0)),             # b2/ln_a/ln_b/fb1/fb2 [5,32]
        ],
        out_specs=pl.BlockSpec((b * n, OUTDIM), lambda i: (0, 0)),
        compiler_params=pltpu.CompilerParams(dimension_semantics=("arbitrary",)),
    )(x_flat, adj_bd, w1_slab, w2_slab, b64, b32)

    return adj4, out.reshape(b, n, OUTDIM)


def reference_forward(graph_nodes, adj4, params):
    """Pure-JAX reference mirroring the PyTorch forward (eval mode)."""
    gw1, gb1, gw2, gb2, ln_a, ln_b, fw1, fb1, fw2, fb2 = params
    heads = []
    for h in range(H):
        a = adj4[:, h]                                          # [B, N, N]
        s1 = graph_nodes @ gw1[h]
        h1 = jax.nn.relu(jnp.einsum('bij,bjk->bik', a, s1) + gb1[h])
        s2 = h1 @ gw2[h]
        heads.append(jnp.einsum('bij,bjk->bik', a, s2) + gb2[h])
    g = jnp.concatenate(heads, axis=-1)
    mean = g.mean(-1, keepdims=True)
    std = jnp.sqrt(((g - mean) ** 2).sum(-1, keepdims=True) / (OUTDIM - 1))
    gn = ln_a * (g - mean) / (std + EPS) + ln_b
    gf = gn + graph_nodes
    f = jax.nn.relu(gf @ fw1 + fb1) @ fw2 + fb2
    return f + gf


def make_params(key):
    ks = jax.random.split(key, 10)
    scale = 0.1
    gw1 = scale * jax.random.normal(ks[0], (H, INDIM, HIDDIM), jnp.float32)
    gb1 = scale * jax.random.normal(ks[1], (H, HIDDIM), jnp.float32)
    gw2 = scale * jax.random.normal(ks[2], (H, HIDDIM, D_K), jnp.float32)
    gb2 = scale * jax.random.normal(ks[3], (H, D_K), jnp.float32)
    ln_a = jnp.ones((1, OUTDIM), jnp.float32)
    ln_b = jnp.zeros((1, OUTDIM), jnp.float32)
    fw1 = scale * jax.random.normal(ks[4], (INDIM, HIDDIM), jnp.float32)
    fb1 = scale * jax.random.normal(ks[5], (1, HIDDIM), jnp.float32)
    fw2 = scale * jax.random.normal(ks[6], (HIDDIM, OUTDIM), jnp.float32)
    fb2 = scale * jax.random.normal(ks[7], (1, OUTDIM), jnp.float32)
    return (gw1, gb1, gw2, gb2, ln_a, ln_b, fw1, fb1, fw2, fb2)


if __name__ == "__main__":
    key = jax.random.PRNGKey(0)
    k_x, k_g, k_p = jax.random.split(key, 3)

    graph_nodes = jax.random.normal(k_x, (B, N, INDIM), jnp.float32)
    # binary-ish adjacency for the n_graph=2 input graphs
    graph = (jax.random.uniform(k_g, (B, N_GRAPH, N, N)) > 0.5).astype(jnp.float32)
    params = make_params(k_p)

    # one-time weight fusion/packing (hoisted out of the per-call path)
    fused = prepare_fused_params(params)

    adj, out = jax.block_until_ready(
        graph_module_forward(graph_nodes, graph, *fused))

    # validate the torch.stack/view head ordering independently: [g0, g0, g1, g1]
    assert adj.shape == (B, H, N, N)
    assert jnp.array_equal(adj[:, 0], graph[:, 0]) and jnp.array_equal(adj[:, 1], graph[:, 0])
    assert jnp.array_equal(adj[:, 2], graph[:, 1]) and jnp.array_equal(adj[:, 3], graph[:, 1])

    ref = reference_forward(graph_nodes, adj, params)
    assert out.shape == (B, N, OUTDIM)
    assert jnp.allclose(out, ref, atol=1e-4, rtol=1e-4), "mismatch vs JAX reference"

    # TODO(synk): get_adj / b_normal path (graph.numel()==0 branch) not implemented;
    # the module's edge_layer_1 / edge_layer_2 / combined_dim are never defined in __init__.
    print("KERNEL_OK")
</pallas_src>

<mosaic_0001>
module attributes {stable_mosaic.version = 11 : i64} {
  func.func @graph_module_kernel(%arg0: i32, %arg1: memref<16x32xf32, #tpu.memory_space<vmem>>, %arg2: memref<2x16x16xf32, #tpu.memory_space<vmem>>, %arg3: memref<64x64xf32, #tpu.memory_space<vmem>>, %arg4: memref<192x32xf32, #tpu.memory_space<vmem>>, %arg5: memref<2x64xf32, #tpu.memory_space<vmem>>, %arg6: memref<5x32xf32, #tpu.memory_space<vmem>>, %arg7: memref<16x32xf32, #tpu.memory_space<vmem>>) attributes {dimension_semantics = [#tpu.dimension_semantics<arbitrary>], iteration_bounds = array<i64: 1>, scalar_prefetch = 0 : i64, scratch_operands = 0 : i64, tpu.core_type = #tpu.core_type<tc>, window_params = [{pipeline_mode = #tpu.pipeline_mode<synchronous>, transform_indices = @transform_0, window_bounds = array<i64: 16, 32>}, {pipeline_mode = #tpu.pipeline_mode<synchronous>, transform_indices = @transform_1, window_bounds = array<i64: 2, 16, 16>}, {pipeline_mode = #tpu.pipeline_mode<synchronous>, transform_indices = @transform_2, window_bounds = array<i64: 64, 64>}, {pipeline_mode = #tpu.pipeline_mode<synchronous>, transform_indices = @transform_3, window_bounds = array<i64: 192, 32>}, {pipeline_mode = #tpu.pipeline_mode<synchronous>, transform_indices = @transform_4, window_bounds = array<i64: 2, 64>}, {pipeline_mode = #tpu.pipeline_mode<synchronous>, transform_indices = @transform_5, window_bounds = array<i64: 5, 32>}, {pipeline_mode = #tpu.pipeline_mode<synchronous>, transform_indices = @transform_6, window_bounds = array<i64: 16, 32>}]} {
    %c0 = arith.constant 0 : index
    %c0_0 = arith.constant 0 : index
    %0 = vector.load %arg1[%c0, %c0_0] : memref<16x32xf32, #tpu.memory_space<vmem>>, vector<16x32xf32>
    %c0_1 = arith.constant 0 : index
    %c0_2 = arith.constant 0 : index
    %c0_3 = arith.constant 0 : index
    %1 = vector.load %arg2[%c0_1, %c0_2, %c0_3] : memref<2x16x16xf32, #tpu.memory_space<vmem>>, vector<1x16x16xf32>
    %2 = vector.shape_cast %1 : vector<1x16x16xf32> to vector<16x16xf32>
    %c1 = arith.constant 1 : index
    %c0_4 = arith.constant 0 : index
    %c0_5 = arith.constant 0 : index
    %3 = vector.load %arg2[%c1, %c0_4, %c0_5] : memref<2x16x16xf32, #tpu.memory_space<vmem>>, vector<1x16x16xf32>
    %4 = vector.shape_cast %3 : vector<1x16x16xf32> to vector<16x16xf32>
    %c0_6 = arith.constant 0 : index
    %c0_7 = arith.constant 0 : index
    %5 = vector.load %arg3[%c0_6, %c0_7] : memref<64x64xf32, #tpu.memory_space<vmem>>, vector<32x64xf32>
    %c32 = arith.constant 32 : index
    %c0_8 = arith.constant 0 : index
    %6 = vector.load %arg3[%c32, %c0_8] : memref<64x64xf32, #tpu.memory_space<vmem>>, vector<32x64xf32>
    %c0_9 = arith.constant 0 : index
    %c0_10 = arith.constant 0 : index
    %7 = vector.load %arg4[%c0_9, %c0_10] : memref<192x32xf32, #tpu.memory_space<vmem>>, vector<64x32xf32>
    %c64 = arith.constant 64 : index
    %c0_11 = arith.constant 0 : index
    %8 = vector.load %arg4[%c64, %c0_11] : memref<192x32xf32, #tpu.memory_space<vmem>>, vector<64x32xf32>
    %c128 = arith.constant 128 : index
    %c0_12 = arith.constant 0 : index
    %9 = vector.load %arg4[%c128, %c0_12] : memref<192x32xf32, #tpu.memory_space<vmem>>, vector<32x32xf32>
    %c160 = arith.constant 160 : index
    %c0_13 = arith.constant 0 : index
    %10 = vector.load %arg4[%c160, %c0_13] : memref<192x32xf32, #tpu.memory_space<vmem>>, vector<32x32xf32>
    %c0_14 = arith.constant 0 : index
    %c0_15 = arith.constant 0 : index
    %11 = vector.load %arg5[%c0_14, %c0_15] : memref<2x64xf32, #tpu.memory_space<vmem>>, vector<1x64xf32>
    %c1_16 = arith.constant 1 : index
    %c0_17 = arith.constant 0 : index
    %12 = vector.load %arg5[%c1_16, %c0_17] : memref<2x64xf32, #tpu.memory_space<vmem>>, vector<1x64xf32>
    %c0_18 = arith.constant 0 : index
    %c0_19 = arith.constant 0 : index
    %13 = vector.load %arg6[%c0_18, %c0_19] : memref<5x32xf32, #tpu.memory_space<vmem>>, vector<1x32xf32>
    %c1_20 = arith.constant 1 : index
    %c0_21 = arith.constant 0 : index
    %14 = vector.load %arg6[%c1_20, %c0_21] : memref<5x32xf32, #tpu.memory_space<vmem>>, vector<1x32xf32>
    %c2 = arith.constant 2 : index
    %c0_22 = arith.constant 0 : index
    %15 = vector.load %arg6[%c2, %c0_22] : memref<5x32xf32, #tpu.memory_space<vmem>>, vector<1x32xf32>
    %c3 = arith.constant 3 : index
    %c0_23 = arith.constant 0 : index
    %16 = vector.load %arg6[%c3, %c0_23] : memref<5x32xf32, #tpu.memory_space<vmem>>, vector<1x32xf32>
    %c4 = arith.constant 4 : index
    %c0_24 = arith.constant 0 : index
    %17 = vector.load %arg6[%c4, %c0_24] : memref<5x32xf32, #tpu.memory_space<vmem>>, vector<1x32xf32>
    %cst = arith.constant dense<0.000000e+00> : vector<16x64xf32>
    %18 = tpu.matmul %0, %5, %cst {dimension_numbers = #tpu.dot_dimension_numbers<[1], [0], [0], [1], [0, 0, 1, 1], [], []>} : vector<16x32xf32>, vector<32x64xf32>, vector<16x64xf32> -> vector<16x64xf32>
    %cst_25 = arith.constant dense<0.000000e+00> : vector<16x64xf32>
    %19 = tpu.matmul %2, %18, %cst_25 {dimension_numbers = #tpu.dot_dimension_numbers<[1], [0], [0], [1], [0, 0, 1, 1], [], []>} : vector<16x16xf32>, vector<16x64xf32>, vector<16x64xf32> -> vector<16x64xf32>
    %20 = vector.broadcast %11 : vector<1x64xf32> to vector<16x64xf32>
    %21 = arith.addf %19, %20 : vector<16x64xf32>
    %cst_26 = arith.constant 0.000000e+00 : f32
    %22 = vector.broadcast %cst_26 : f32 to vector<16x64xf32>
    %23 = arith.maximumf %21, %22 : vector<16x64xf32>
    %cst_27 = arith.constant dense<0.000000e+00> : vector<16x64xf32>
    %24 = tpu.matmul %0, %6, %cst_27 {dimension_numbers = #tpu.dot_dimension_numbers<[1], [0], [0], [1], [0, 0, 1, 1], [], []>} : vector<16x32xf32>, vector<32x64xf32>, vector<16x64xf32> -> vector<16x64xf32>
    %cst_28 = arith.constant dense<0.000000e+00> : vector<16x64xf32>
    %25 = tpu.matmul %4, %24, %cst_28 {dimension_numbers = #tpu.dot_dimension_numbers<[1], [0], [0], [1], [0, 0, 1, 1], [], []>} : vector<16x16xf32>, vector<16x64xf32>, vector<16x64xf32> -> vector<16x64xf32>
    %26 = vector.broadcast %12 : vector<1x64xf32> to vector<16x64xf32>
    %27 = arith.addf %25, %26 : vector<16x64xf32>
    %cst_29 = arith.constant 0.000000e+00 : f32
    %28 = vector.broadcast %cst_29 : f32 to vector<16x64xf32>
    %29 = arith.maximumf %27, %28 : vector<16x64xf32>
    %cst_30 = arith.constant dense<0.000000e+00> : vector<16x32xf32>
    %30 = tpu.matmul %23, %7, %cst_30 {dimension_numbers = #tpu.dot_dimension_numbers<[1], [0], [0], [1], [0, 0, 1, 1], [], []>} : vector<16x64xf32>, vector<64x32xf32>, vector<16x32xf32> -> vector<16x32xf32>
    %cst_31 = arith.constant dense<0.000000e+00> : vector<16x32xf32>
    %31 = tpu.matmul %2, %30, %cst_31 {dimension_numbers = #tpu.dot_dimension_numbers<[1], [0], [0], [1], [0, 0, 1, 1], [], []>} : vector<16x16xf32>, vector<16x32xf32>, vector<16x32xf32> -> vector<16x32xf32>
    %cst_32 = arith.constant dense<0.000000e+00> : vector<16x32xf32>
    %32 = tpu.matmul %29, %8, %cst_32 {dimension_numbers = #tpu.dot_dimension_numbers<[1], [0], [0], [1], [0, 0, 1, 1], [], []>} : vector<16x64xf32>, vector<64x32xf32>, vector<16x32xf32> -> vector<16x32xf32>
    %cst_33 = arith.constant dense<0.000000e+00> : vector<16x32xf32>
    %33 = tpu.matmul %4, %32, %cst_33 {dimension_numbers = #tpu.dot_dimension_numbers<[1], [0], [0], [1], [0, 0, 1, 1], [], []>} : vector<16x16xf32>, vector<16x32xf32>, vector<16x32xf32> -> vector<16x32xf32>
    %34 = arith.addf %31, %33 : vector<16x32xf32>
    %35 = vector.broadcast %13 : vector<1x32xf32> to vector<16x32xf32>
    %36 = arith.addf %34, %35 : vector<16x32xf32>
    %cst_34 = arith.constant dense<0.000000e+00> : vector<16xf32>
    %37 = vector.multi_reduction <add>, %36, %cst_34 [1] : vector<16x32xf32> to vector<16xf32>
    %38 = vector.shape_cast %37 : vector<16xf32> to vector<16x1xf32>
    %cst_35 = arith.constant 3.200000e+01 : f32
    %39 = vector.broadcast %cst_35 : f32 to vector<16x1xf32>
    %40 = arith.divf %38, %39 : vector<16x1xf32>
    %41 = vector.broadcast %40 : vector<16x1xf32> to vector<16x32xf32>
    %42 = arith.subf %36, %41 : vector<16x32xf32>
    %43 = arith.mulf %42, %42 : vector<16x32xf32>
    %cst_36 = arith.constant dense<0.000000e+00> : vector<16xf32>
    %44 = vector.multi_reduction <add>, %43, %cst_36 [1] : vector<16x32xf32> to vector<16xf32>
    %45 = vector.shape_cast %44 : vector<16xf32> to vector<16x1xf32>
    %cst_37 = arith.constant 3.100000e+01 : f32
    %46 = vector.broadcast %cst_37 : f32 to vector<16x1xf32>
    %47 = arith.divf %45, %46 : vector<16x1xf32>
    %48 = math.sqrt %47 : vector<16x1xf32>
    %cst_38 = arith.constant 9.99999997E-7 : f32
    %49 = vector.broadcast %cst_38 : f32 to vector<16x1xf32>
    %50 = arith.addf %48, %49 : vector<16x1xf32>
    %51 = tpu.reciprocal %50 : vector<16x1xf32> -> vector<16x1xf32>
    %52 = vector.broadcast %40 : vector<16x1xf32> to vector<16x32xf32>
    %53 = arith.subf %36, %52 : vector<16x32xf32>
    %54 = vector.broadcast %14 : vector<1x32xf32> to vector<16x32xf32>
    %55 = arith.mulf %54, %53 : vector<16x32xf32>
    %56 = vector.broadcast %51 : vector<16x1xf32> to vector<16x32xf32>
    %57 = arith.mulf %55, %56 : vector<16x32xf32>
    %58 = vector.broadcast %15 : vector<1x32xf32> to vector<16x32xf32>
    %59 = arith.addf %57, %58 : vector<16x32xf32>
    %60 = arith.addf %59, %0 : vector<16x32xf32>
    %cst_39 = arith.constant dense<0.000000e+00> : vector<16x32xf32>
    %61 = tpu.matmul %60, %9, %cst_39 {dimension_numbers = #tpu.dot_dimension_numbers<[1], [0], [0], [1], [0, 0, 1, 1], [], []>} : vector<16x32xf32>, vector<32x32xf32>, vector<16x32xf32> -> vector<16x32xf32>
    %62 = vector.broadcast %16 : vector<1x32xf32> to vector<16x32xf32>
    %63 = arith.addf %61, %62 : vector<16x32xf32>
    %cst_40 = arith.constant 0.000000e+00 : f32
    %64 = vector.broadcast %cst_40 : f32 to vector<16x32xf32>
    %65 = arith.maximumf %63, %64 : vector<16x32xf32>
    %cst_41 = arith.constant dense<0.000000e+00> : vector<16x32xf32>
    %66 = tpu.matmul %65, %10, %cst_41 {dimension_numbers = #tpu.dot_dimension_numbers<[1], [0], [0], [1], [0, 0, 1, 1], [], []>} : vector<16x32xf32>, vector<32x32xf32>, vector<16x32xf32> -> vector<16x32xf32>
    %67 = vector.broadcast %17 : vector<1x32xf32> to vector<16x32xf32>
    %68 = arith.addf %66, %67 : vector<16x32xf32>
    %69 = arith.addf %68, %60 : vector<16x32xf32>
    %c0_42 = arith.constant 0 : index
    %c0_43 = arith.constant 0 : index
    %70 = vector.load %arg7[%c0_42, %c0_43] : memref<16x32xf32, #tpu.memory_space<vmem>>, vector<16x32xf32>
    tpu.vector_store %arg7[%c0_42, %c0_43], %69 {strides = array<i32>} : memref<16x32xf32, #tpu.memory_space<vmem>>, vector<16x32xf32>,
    return
  }
  func.func @transform_0(%arg0: i32) -> (i32, i32) {
    %c0_i32 = arith.constant 0 : i32
    %c0_i32_0 = arith.constant 0 : i32
    %c0_i32_1 = arith.constant 0 : i32
    return %c0_i32, %c0_i32_0 : i32, i32
  }
  func.func @transform_1(%arg0: i32) -> (i32, i32, i32) {
    %c0_i32 = arith.constant 0 : i32
    %c0_i32_0 = arith.constant 0 : i32
    %c0_i32_1 = arith.constant 0 : i32
    %c0_i32_2 = arith.constant 0 : i32
    return %c0_i32, %c0_i32_0, %c0_i32_1 : i32, i32, i32
  }
  func.func @transform_2(%arg0: i32) -> (i32, i32) {
    %c0_i32 = arith.constant 0 : i32
    %c0_i32_0 = arith.constant 0 : i32
    %c0_i32_1 = arith.constant 0 : i32
    return %c0_i32, %c0_i32_0 : i32, i32
  }
  func.func @transform_3(%arg0: i32) -> (i32, i32) {
    %c0_i32 = arith.constant 0 : i32
    %c0_i32_0 = arith.constant 0 : i32
    %c0_i32_1 = arith.constant 0 : i32
    return %c0_i32, %c0_i32_0 : i32, i32
  }
  func.func @transform_4(%arg0: i32) -> (i32, i32) {
    %c0_i32 = arith.constant 0 : i32
    %c0_i32_0 = arith.constant 0 : i32
    %c0_i32_1 = arith.constant 0 : i32
    return %c0_i32, %c0_i32_0 : i32, i32
  }
  func.func @transform_5(%arg0: i32) -> (i32, i32) {
    %c0_i32 = arith.constant 0 : i32
    %c0_i32_0 = arith.constant 0 : i32
    %c0_i32_1 = arith.constant 0 : i32
    return %c0_i32, %c0_i32_0 : i32, i32
  }
  func.func @transform_6(%arg0: i32) -> (i32, i32) {
    %c0_i32 = arith.constant 0 : i32
    %c0_i32_0 = arith.constant 0 : i32
    %c0_i32_1 = arith.constant 0 : i32
    return %c0_i32, %c0_i32_0 : i32, i32
  }
}

</mosaic_0001>

<llo_original>
// kernel: graph_module_forward.1
$region0: #{graph_module_forward.1}
  #allocation0 [shape = 'u32[]', space=smem, size = 0x4, offset = 0x4, fixed_abs, tag = 'smem constant byte address 0x4 - core index']
  #allocation1 [shape = 'u32[144,128]{1,0:T(1,128)}', space=vmem, size = 0x12000, scoped, tag = 'internal scratch']
  %s0 = inlined_call_operand.vmem [shape: f32[16,32], index: 0, kind: input, shape index: {}]
  %s1 = inlined_call_operand.vmem [shape: f32[2,16,16], index: 1, kind: input, shape index: {}]
  %s2 = inlined_call_operand.vmem [shape: f32[64,64], index: 2, kind: input, shape index: {}]
  %s3 = inlined_call_operand.vmem [shape: f32[192,32], index: 3, kind: input, shape index: {}]
  %s4 = inlined_call_operand.vmem [shape: f32[2,64], index: 4, kind: input, shape index: {}]
  %s5 = inlined_call_operand.vmem [shape: f32[5,32], index: 5, kind: input, shape index: {}]
  %s6 = inlined_call_operand.hbm [shape: f32[16,32], index: 6, kind: output, shape index: {}]
  %s7 = sld [smem:[#allocation0]]
  $region34: #{graph_module_forward.1} parent=0
    _
  %s9 = ssub.s32 1, %s7
  %s10 = scalar_select 0, %s9, %s7
  $region1: #{graph_module_forward.1} parent=0
    #allocation2 [shape = 'u8[8192]{0}', space=vmem, size = 0x2000, scoped, tag = 'output window, operand 0, single buffered']
    #allocation3 [shape = 's32[1]{0}', space=sflag, size = 0x4, scoped, tag = 'scoped memory for graph_module_forward.1']
    %11 = vsyncpa [#allocation3], 0
    // Predicated region
    $region2: #{graph_module_forward.1} parent=1 // pred_check
      _
    $region3: #{graph_module_forward.1} parent=1 // pred_check_branch
      %13 = sbr.rel (0) target = $region5
    $region4: #{graph_module_forward.1} parent=1 // pred_region
      _
    $region5: #{graph_module_forward.1} parent=1 // pred_fallthru
      _
    // Predicated region
    $region6: #{graph_module_forward.1} parent=1 // pred_check
      _
    $region7: #{graph_module_forward.1} parent=1 // pred_check_branch
      %15 = sbr.rel (0) target = $region9
    $region8: #{graph_module_forward.1} parent=1 // pred_region
      _
    $region9: #{graph_module_forward.1} parent=1 // pred_fallthru
      _
    // Predicated region
    $region10: #{graph_module_forward.1} parent=1 // pred_check
      _
    $region11: #{graph_module_forward.1} parent=1 // pred_check_branch
      %17 = sbr.rel (0) target = $region13
    $region12: #{graph_module_forward.1} parent=1 // pred_region
      _
    $region13: #{graph_module_forward.1} parent=1 // pred_fallthru
      _
    // Predicated region
    $region14: #{graph_module_forward.1} parent=1 // pred_check
      _
    $region15: #{graph_module_forward.1} parent=1 // pred_check_branch
      %19 = sbr.rel (0) target = $region17
    $region16: #{graph_module_forward.1} parent=1 // pred_region
      _
    $region17: #{graph_module_forward.1} parent=1 // pred_fallthru
      _
    // Predicated region
    $region18: #{graph_module_forward.1} parent=1 // pred_check
      _
    $region19: #{graph_module_forward.1} parent=1 // pred_check_branch
      %21 = sbr.rel (0) target = $region21
    $region20: #{graph_module_forward.1} parent=1 // pred_region
      _
    $region21: #{graph_module_forward.1} parent=1 // pred_fallthru
      _
    // Predicated region
    $region22: #{graph_module_forward.1} parent=1 // pred_check
      _
    $region23: #{graph_module_forward.1} parent=1 // pred_check_branch
      %23 = sbr.rel (0) target = $region25
    $region24: #{graph_module_forward.1} parent=1 // pred_region
      _
    $region25: #{graph_module_forward.1} parent=1 // pred_fallthru
      _
    %v24 = vld [vmem:[%s0] sm:$0xff]
    %v25 = vld [vmem:[%s0 + $0x8] sm:$0xff]
    %v26 = vld [vmem:[%s1] sm:$0xff]
    %v27 = vld [vmem:[%s1 + $0x8] sm:$0xff]
    %s28 = scalar_lea.vmem %s1, 16
    %v29 = vld [vmem:[%s28] sm:$0xff]
    %v30 = vld [vmem:[%s28 + $0x8] sm:$0xff]
    %v31 = vld [vmem:[%s2] sm:$0xff]
    %v32 = vld [vmem:[%s2 + $0x8] sm:$0xff]
    %v33 = vld [vmem:[%s2 + $0x10] sm:$0xff]
    %v34 = vld [vmem:[%s2 + $0x18] sm:$0xff]
    %v35 = vld [vmem:[%s2 + $0x20] sm:$0xff]
    %v36 = vld [vmem:[%s2 + $0x28] sm:$0xff]
    %v37 = vld [vmem:[%s2 + $0x30] sm:$0xff]
    %v38 = vld [vmem:[%s2 + $0x38] sm:$0xff]
    %v39 = vld [vmem:[%s3] sm:$0xff]
    %v40 = vld [vmem:[%s3 + $0x8] sm:$0xff]
    %v41 = vld [vmem:[%s3 + $0x10] sm:$0xff]
    %v42 = vld [vmem:[%s3 + $0x18] sm:$0xff]
    %v43 = vld [vmem:[%s3 + $0x20] sm:$0xff]
    %v44 = vld [vmem:[%s3 + $0x28] sm:$0xff]
    %v45 = vld [vmem:[%s3 + $0x30] sm:$0xff]
    %v46 = vld [vmem:[%s3 + $0x38] sm:$0xff]
    %v47 = vld [vmem:[%s3 + $0x40] sm:$0xff]
    %v48 = vld [vmem:[%s3 + $0x48] sm:$0xff]
    %v49 = vld [vmem:[%s3 + $0x50] sm:$0xff]
    %v50 = vld [vmem:[%s3 + $0x58] sm:$0xff]
    %v51 = vld [vmem:[%s3 + $0x60] sm:$0xff]
    %v52 = vld [vmem:[%s3 + $0x68] sm:$0xff]
    %v53 = vld [vmem:[%s3 + $0x70] sm:$0xff]
    %v54 = vld [vmem:[%s3 + $0x78] sm:$0xff]
    %v55 = vld [vmem:[%s3 + $0x80] sm:$0xff]
    %v56 = vld [vmem:[%s3 + $0x88] sm:$0xff]
    %v57 = vld [vmem:[%s3 + $0x90] sm:$0xff]
    %v58 = vld [vmem:[%s3 + $0x98] sm:$0xff]
    %v59 = vld [vmem:[%s3 + $0xa0] sm:$0xff]
    %v60 = vld [vmem:[%s3 + $0xa8] sm:$0xff]
    %v61 = vld [vmem:[%s3 + $0xb0] sm:$0xff]
    %v62 = vld [vmem:[%s3 + $0xb8] sm:$0xff]
    %v63 = vld [vmem:[%s4] sm:$0x1]
    %v64 = vld [vmem:[%s4 + $0x1] sm:$0x1]
    %v65 = vld [vmem:[%s5] sm:$0x1]
    %v66 = vld [vmem:[%s5 + $0x1] sm:$0x1]
    %v67 = vld [vmem:[%s5 + $0x2] sm:$0x1]
    %v68 = vld [vmem:[%s5 + $0x3] sm:$0x1]
    %v69 = vld [vmem:[%s5 + $0x4] sm:$0x1]
    %vm70 = vcmask 261120
    %v72 = vsel %vm70, %v24, 0
    %v75 = vsel %vm70, %v25, 0
    %77 = vmatprep.subr.mxu0 0.0
    %78 = vmatpush1.msra.mxu0 0.0
    %79 = vmatprep.subr.mxu0 0.0
    %80 = vmatpush1.msra.mxu0 0.0
    %81 = vmatprep.subr.mxu0 0.0
    %82 = vmatpush1.msra.mxu0 0.0
    %83 = vmatprep.subr.mxu0 0.0
    %84 = vmatpush1.msra.mxu0 0.0
    %85 = vmatprep.subr.mxu0 0.0
    %86 = vmatpush1.msra.mxu0 0.0
    %87 = vmatprep.subr.mxu0 0.0
    %88 = vmatpush1.msra.mxu0 0.0
    %89 = vmatprep.subr.mxu0 0.0
    %90 = vmatpush1.msra.mxu0 0.0
    %91 = vmatprep.subr.mxu0 0.0
    %92 = vmatpush1.msra.mxu0 0.0
    %93 = vmatprep.subr.mxu0 0.0
    %94 = vmatpush1.msra.mxu0 0.0
    %95 = vmatprep.subr.mxu0 0.0
    %96 = vmatpush1.msra.mxu0 0.0
    %97 = vmatprep.subr.mxu0 0.0
    %98 = vmatpush1.msra.mxu0 0.0
    %99 = vmatprep.subr.mxu0 0.0
    %100 = vmatpush1.msra.mxu0 0.0
    %101 = vmatprep.subr.mxu0 0.0
    %102 = vmatpush1.msra.mxu0 %v34
    %103 = vmatprep.subr.mxu0 0.0
    %104 = vmatpush1.msra.mxu0 %v33
    %105 = vmatprep.subr.mxu0 0.0
    %106 = vmatpush1.msra.mxu0 %v32
    %107 = vmatprep.subr.mxu0 0.0
    %108 = vmatpush1.msra.mxu0 %v31
    %109 = vmatprep.subr.mxu0 0.0
    %110 = vmatpush2.msra.mxu0 0.0
    %111 = vmatprep.subr.mxu0 0.0
    %112 = vmatpush2.msra.mxu0 0.0
    %113 = vmatprep.subr.mxu0 0.0
    %114 = vmatpush2.msra.mxu0 0.0
    %115 = vmatprep.subr.mxu0 0.0
    %116 = vmatpush2.msra.mxu0 0.0
    %117 = vmatprep.subr.mxu0 0.0
    %118 = vmatpush2.msra.mxu0 0.0
    %119 = vmatprep.subr.mxu0 0.0
    %120 = vmatpush2.msra.mxu0 0.0
    %121 = vmatprep.subr.mxu0 0.0
    %122 = vmatpush2.msra.mxu0 0.0
    %123 = vmatprep.subr.mxu0 0.0
    %124 = vmatpush2.msra.mxu0 0.0
    %125 = vmatprep.subr.mxu0 0.0
    %126 = vmatpush2.msra.mxu0 0.0
    %127 = vmatprep.subr.mxu0 0.0
    %128 = vmatpush2.msra.mxu0 0.0
    %129 = vmatprep.subr.mxu0 0.0
    %130 = vmatpush2.msra.mxu0 0.0
    %131 = vmatprep.subr.mxu0 0.0
    %132 = vmatpush2.msra.mxu0 0.0
    %133 = vmatprep.subr.mxu0 0.0
    %134 = vmatpush2.msra.mxu0 0.0
    %135 = vmatprep.subr.mxu0 0.0
    %136 = vmatpush2.msra.mxu0 0.0
    %137 = vmatprep.subr.mxu0 0.0
    %138 = vmatpush2.msra.mxu0 0.0
    %139 = vmatprep.subr.mxu0 0.0
    %140 = vmatpush2.msra.mxu0 0.0
    %141 = vmatprep.mubr.f32.mxu0 0.0
    %142 = vmatmul.mubr.f32.gmra.mxu0 %v72
    %v143 = vpop.f32.mrf.mxu0
    %v144 = vadd.f32 0.0, %v143
    %v145 = vpop.f32.mrf.mxu0
    %146 = vmatprep.mubr.f32.mxu0 0.0
    %147 = vmatmul.mubr.f32.gmra.mxu0 %v75
    %v148 = vpop.f32.mrf.mxu0
    %v149 = vadd.f32 0.0, %v148
    %v150 = vpop.f32.mrf.mxu0
    %151 = vdwg.mxu0
    %v152 = vlaneseq
    %v153 = vshrl.u32 %v152, 7
    %v154 = vsub.s32 0, %v153
    %v155 = vrot.slane %v63, %v154
    %vm156 = vcmask 130048
    %v158 = vsel %vm156, %v26, 0
    %v161 = vsel %vm156, %v27, 0
    %163 = vmatprep.subr.mxu0 0.0
    %164 = vmatpush1.msra.mxu0 0.0
    %165 = vmatprep.subr.mxu0 0.0
    %166 = vmatpush1.msra.mxu0 0.0
    %167 = vmatprep.subr.mxu0 0.0
    %168 = vmatpush1.msra.mxu0 0.0
    %169 = vmatprep.subr.mxu0 0.0
    %170 = vmatpush1.msra.mxu0 0.0
    %171 = vmatprep.subr.mxu0 0.0
    %172 = vmatpush1.msra.mxu0 0.0
    %173 = vmatprep.subr.mxu0 0.0
    %174 = vmatpush1.msra.mxu0 0.0
    %175 = vmatprep.subr.mxu0 0.0
    %176 = vmatpush1.msra.mxu0 0.0
    %177 = vmatprep.subr.mxu0 0.0
    %178 = vmatpush1.msra.mxu0 0.0
    %179 = vmatprep.subr.mxu0 0.0
    %180 = vmatpush1.msra.mxu0 0.0
    %181 = vmatprep.subr.mxu0 0.0
    %182 = vmatpush1.msra.mxu0 0.0
    %183 = vmatprep.subr.mxu0 0.0
    %184 = vmatpush1.msra.mxu0 0.0
    %185 = vmatprep.subr.mxu0 0.0
    %186 = vmatpush1.msra.mxu0 0.0
    %187 = vmatprep.subr.mxu0 0.0
    %188 = vmatpush1.msra.mxu0 0.0
    %189 = vmatprep.subr.mxu0 0.0
    %190 = vmatpush1.msra.mxu0 0.0
    %191 = vmatprep.subr.mxu0 0.0
    %192 = vmatpush1.msra.mxu0 %v149
    %193 = vmatprep.subr.mxu0 0.0
    %194 = vmatpush1.msra.mxu0 %v144
    %195 = vmatprep.subr.mxu0 0.0
    %196 = vmatpush2.msra.mxu0 0.0
    %197 = vmatprep.subr.mxu0 0.0
    %198 = vmatpush2.msra.mxu0 0.0
    %199 = vmatprep.subr.mxu0 0.0
    %200 = vmatpush2.msra.mxu0 0.0
    %201 = vmatprep.subr.mxu0 0.0
    %202 = vmatpush2.msra.mxu0 0.0
    %203 = vmatprep.subr.mxu0 0.0
    %204 = vmatpush2.msra.mxu0 0.0
    %205 = vmatprep.subr.mxu0 0.0
    %206 = vmatpush2.msra.mxu0 0.0
    %207 = vmatprep.subr.mxu0 0.0
    %208 = vmatpush2.msra.mxu0 0.0
    %209 = vmatprep.subr.mxu0 0.0
    %210 = vmatpush2.msra.mxu0 0.0
    %211 = vmatprep.subr.mxu0 0.0
    %212 = vmatpush2.msra.mxu0 0.0
    %213 = vmatprep.subr.mxu0 0.0
    %214 = vmatpush2.msra.mxu0 0.0
    %215 = vmatprep.subr.mxu0 0.0
    %216 = vmatpush2.msra.mxu0 0.0
    %217 = vmatprep.subr.mxu0 0.0
    %218 = vmatpush2.msra.mxu0 0.0
    %219 = vmatprep.subr.mxu0 0.0
    %220 = vmatpush2.msra.mxu0 0.0
    %221 = vmatprep.subr.mxu0 0.0
    %222 = vmatpush2.msra.mxu0 0.0
    %223 = vmatprep.subr.mxu0 0.0
    %224 = vmatpush2.msra.mxu0 0.0
    %225 = vmatprep.subr.mxu0 0.0
    %226 = vmatpush2.msra.mxu0 0.0
    %227 = vmatprep.mubr.f32.mxu0 0.0
    %228 = vmatmul.mubr.f32.gmra.mxu0 %v158
    %v229 = vpop.f32.mrf.mxu0
    %v230 = vadd.f32 %v155, %v229
    %v231 = vpop.f32.mrf.mxu0
    %232 = vmatprep.mubr.f32.mxu0 0.0
    %233 = vmatmul.mubr.f32.gmra.mxu0 %v161
    %v234 = vpop.f32.mrf.mxu0
    %v235 = vadd.f32 %v155, %v234
    %v236 = vpop.f32.mrf.mxu0
    %237 = vdwg.mxu0
    %v238 = vmax.f32 %v230, 0.0
    %v239 = vmax.f32 %v235, 0.0
    %240 = vmatprep.subr.mxu0 0.0
    %241 = vmatpush1.msra.mxu0 0.0
    %242 = vmatprep.subr.mxu0 0.0
    %243 = vmatpush1.msra.mxu0 0.0
    %244 = vmatprep.subr.mxu0 0.0
    %245 = vmatpush1.msra.mxu0 0.0
    %246 = vmatprep.subr.mxu0 0.0
    %247 = vmatpush1.msra.mxu0 0.0
    %248 = vmatprep.subr.mxu0 0.0
    %249 = vmatpush1.msra.mxu0 0.0
    %250 = vmatprep.subr.mxu0 0.0
    %251 = vmatpush1.msra.mxu0 0.0
    %252 = vmatprep.subr.mxu0 0.0
    %253 = vmatpush1.msra.mxu0 0.0
    %254 = vmatprep.subr.mxu0 0.0
    %255 = vmatpush1.msra.mxu0 0.0
    %256 = vmatprep.subr.mxu0 0.0
    %257 = vmatpush1.msra.mxu0 0.0
    %258 = vmatprep.subr.mxu0 0.0
    %259 = vmatpush1.msra.mxu0 0.0
    %260 = vmatprep.subr.mxu0 0.0
    %261 = vmatpush1.msra.mxu0 0.0
    %262 = vmatprep.subr.mxu0 0.0
    %263 = vmatpush1.msra.mxu0 0.0
    %264 = vmatprep.subr.mxu0 0.0
    %265 = vmatpush1.msra.mxu0 %v38
    %266 = vmatprep.subr.mxu0 0.0
    %267 = vmatpush1.msra.mxu0 %v37
    %268 = vmatprep.subr.mxu0 0.0
    %269 = vmatpush1.msra.mxu0 %v36
    %270 = vmatprep.subr.mxu0 0.0
    %271 = vmatpush1.msra.mxu0 %v35
    %272 = vmatprep.subr.mxu0 0.0
    %273 = vmatpush2.msra.mxu0 0.0
    %274 = vmatprep.subr.mxu0 0.0
    %275 = vmatpush2.msra.mxu0 0.0
    %276 = vmatprep.subr.mxu0 0.0
    %277 = vmatpush2.msra.mxu0 0.0
    %278 = vmatprep.subr.mxu0 0.0
    %279 = vmatpush2.msra.mxu0 0.0
    %280 = vmatprep.subr.mxu0 0.0
    %281 = vmatpush2.msra.mxu0 0.0
    %282 = vmatprep.subr.mxu0 0.0
    %283 = vmatpush2.msra.mxu0 0.0
    %284 = vmatprep.subr.mxu0 0.0
    %285 = vmatpush2.msra.mxu0 0.0
    %286 = vmatprep.subr.mxu0 0.0
    %287 = vmatpush2.msra.mxu0 0.0
    %288 = vmatprep.subr.mxu0 0.0
    %289 = vmatpush2.msra.mxu0 0.0
    %290 = vmatprep.subr.mxu0 0.0
    %291 = vmatpush2.msra.mxu0 0.0
    %292 = vmatprep.subr.mxu0 0.0
    %293 = vmatpush2.msra.mxu0 0.0
    %294 = vmatprep.subr.mxu0 0.0
    %295 = vmatpush2.msra.mxu0 0.0
    %296 = vmatprep.subr.mxu0 0.0
    %297 = vmatpush2.msra.mxu0 0.0
    %298 = vmatprep.subr.mxu0 0.0
    %299 = vmatpush2.msra.mxu0 0.0
    %300 = vmatprep.subr.mxu0 0.0
    %301 = vmatpush2.msra.mxu0 0.0
    %302 = vmatprep.subr.mxu0 0.0
    %303 = vmatpush2.msra.mxu0 0.0
    %304 = vmatprep.mubr.f32.mxu0 0.0
    %305 = vmatmul.mubr.f32.gmra.mxu0 %v72
    %v306 = vpop.f32.mrf.mxu0
    %v307 = vadd.f32 0.0, %v306
    %v308 = vpop.f32.mrf.mxu0
    %309 = vmatprep.mubr.f32.mxu0 0.0
    %310 = vmatmul.mubr.f32.gmra.mxu0 %v75
    %v311 = vpop.f32.mrf.mxu0
    %v312 = vadd.f32 0.0, %v311
    %v313 = vpop.f32.mrf.mxu0
    %314 = vdwg.mxu0
    %v315 = vlaneseq
    %v316 = vshrl.u32 %v315, 7
    %v317 = vsub.s32 0, %v316
    %v318 = vrot.slane %v64, %v317
    %v320 = vsel %vm156, %v29, 0
    %v323 = vsel %vm156, %v30, 0
    %325 = vmatprep.subr.mxu0 0.0
    %326 = vmatpush1.msra.mxu0 0.0
    %327 = vmatprep.subr.mxu0 0.0
    %328 = vmatpush1.msra.mxu0 0.0
    %329 = vmatprep.subr.mxu0 0.0
    %330 = vmatpush1.msra.mxu0 0.0
    %331 = vmatprep.subr.mxu0 0.0
    %332 = vmatpush1.msra.mxu0 0.0
    %333 = vmatprep.subr.mxu0 0.0
    %334 = vmatpush1.msra.mxu0 0.0
    %335 = vmatprep.subr.mxu0 0.0
    %336 = vmatpush1.msra.mxu0 0.0
    %337 = vmatprep.subr.mxu0 0.0
    %338 = vmatpush1.msra.mxu0 0.0
    %339 = vmatprep.subr.mxu0 0.0
    %340 = vmatpush1.msra.mxu0 0.0
    %341 = vmatprep.subr.mxu0 0.0
    %342 = vmatpush1.msra.mxu0 0.0
    %343 = vmatprep.subr.mxu0 0.0
    %344 = vmatpush1.msra.mxu0 0.0
    %345 = vmatprep.subr.mxu0 0.0
    %346 = vmatpush1.msra.mxu0 0.0
    %347 = vmatprep.subr.mxu0 0.0
    %348 = vmatpush1.msra.mxu0 0.0
    %349 = vmatprep.subr.mxu0 0.0
    %350 = vmatpush1.msra.mxu0 0.0
    %351 = vmatprep.subr.mxu0 0.0
    %352 = vmatpush1.msra.mxu0 0.0
    %353 = vmatprep.subr.mxu0 0.0
    %354 = vmatpush1.msra.mxu0 %v312
    %355 = vmatprep.subr.mxu0 0.0
    %356 = vmatpush1.msra.mxu0 %v307
    %357 = vmatprep.subr.mxu0 0.0
    %358 = vmatpush2.msra.mxu0 0.0
    %359 = vmatprep.subr.mxu0 0.0
    %360 = vmatpush2.msra.mxu0 0.0
    %361 = vmatprep.subr.mxu0 0.0
    %362 = vmatpush2.msra.mxu0 0.0
    %363 = vmatprep.subr.mxu0 0.0
    %364 = vmatpush2.msra.mxu0 0.0
    %365 = vmatprep.subr.mxu0 0.0
    %366 = vmatpush2.msra.mxu0 0.0
    %367 = vmatprep.subr.mxu0 0.0
    %368 = vmatpush2.msra.mxu0 0.0
    %369 = vmatprep.subr.mxu0 0.0
    %370 = vmatpush2.msra.mxu0 0.0
    %371 = vmatprep.subr.mxu0 0.0
    %372 = vmatpush2.msra.mxu0 0.0
    %373 = vmatprep.subr.mxu0 0.0
    %374 = vmatpush2.msra.mxu0 0.0
    %375 = vmatprep.subr.mxu0 0.0
    %376 = vmatpush2.msra.mxu0 0.0
    %377 = vmatprep.subr.mxu0 0.0
    %378 = vmatpush2.msra.mxu0 0.0
    %379 = vmatprep.subr.mxu0 0.0
    %380 = vmatpush2.msra.mxu0 0.0
    %381 = vmatprep.subr.mxu0 0.0
    %382 = vmatpush2.msra.mxu0 0.0
    %383 = vmatprep.subr.mxu0 0.0
    %384 = vmatpush2.msra.mxu0 0.0
    %385 = vmatprep.subr.mxu0 0.0
    %386 = vmatpush2.msra.mxu0 0.0
    %387 = vmatprep.subr.mxu0 0.0
    %388 = vmatpush2.msra.mxu0 0.0
    %389 = vmatprep.mubr.f32.mxu0 0.0
    %390 = vmatmul.mubr.f32.gmra.mxu0 %v320
    %v391 = vpop.f32.mrf.mxu0
    %v392 = vadd.f32 %v318, %v391
    %v393 = vpop.f32.mrf.mxu0
    %394 = vmatprep.mubr.f32.mxu0 0.0
    %395 = vmatmul.mubr.f32.gmra.mxu0 %v323
    %v396 = vpop.f32.mrf.mxu0
    %v397 = vadd.f32 %v318, %v396
    %v398 = vpop.f32.mrf.mxu0
    %399 = vdwg.mxu0
    %v400 = vmax.f32 %v392, 0.0
    %v401 = vmax.f32 %v397, 0.0
    %vm402 = vcmask 523264
    %v404 = vsel %vm402, %v238, 0
    %v407 = vsel %vm402, %v239, 0
    %409 = vmatprep.subr.mxu0 0.0
    %410 = vmatpush1.msra.mxu0 0.0
    %411 = vmatprep.subr.mxu0 0.0
    %412 = vmatpush1.msra.mxu0 0.0
    %413 = vmatprep.subr.mxu0 0.0
    %414 = vmatpush1.msra.mxu0 0.0
    %415 = vmatprep.subr.mxu0 0.0
    %416 = vmatpush1.msra.mxu0 0.0
    %417 = vmatprep.subr.mxu0 0.0
    %418 = vmatpush1.msra.mxu0 0.0
    %419 = vmatprep.subr.mxu0 0.0
    %420 = vmatpush1.msra.mxu0 0.0
    %421 = vmatprep.subr.mxu0 0.0
    %422 = vmatpush1.msra.mxu0 0.0
    %423 = vmatprep.subr.mxu0 0.0
    %424 = vmatpush1.msra.mxu0 0.0
    %425 = vmatprep.subr.mxu0 0.0
    %426 = vmatpush1.msra.mxu0 %v46
    %427 = vmatprep.subr.mxu0 0.0
    %428 = vmatpush1.msra.mxu0 %v45
    %429 = vmatprep.subr.mxu0 0.0
    %430 = vmatpush1.msra.mxu0 %v44
    %431 = vmatprep.subr.mxu0 0.0
    %432 = vmatpush1.msra.mxu0 %v43
    %433 = vmatprep.subr.mxu0 0.0
    %434 = vmatpush1.msra.mxu0 %v42
    %435 = vmatprep.subr.mxu0 0.0
    %436 = vmatpush1.msra.mxu0 %v41
    %437 = vmatprep.subr.mxu0 0.0
    %438 = vmatpush1.msra.mxu0 %v40
    %439 = vmatprep.subr.mxu0 0.0
    %440 = vmatpush1.msra.mxu0 %v39
    %441 = vmatprep.subr.mxu0 0.0
    %442 = vmatpush2.msra.mxu0 0.0
    %443 = vmatprep.subr.mxu0 0.0
    %444 = vmatpush2.msra.mxu0 0.0
    %445 = vmatprep.subr.mxu0 0.0
    %446 = vmatpush2.msra.mxu0 0.0
    %447 = vmatprep.subr.mxu0 0.0
    %448 = vmatpush2.msra.mxu0 0.0
    %449 = vmatprep.subr.mxu0 0.0
    %450 = vmatpush2.msra.mxu0 0.0
    %451 = vmatprep.subr.mxu0 0.0
    %452 = vmatpush2.msra.mxu0 0.0
    %453 = vmatprep.subr.mxu0 0.0
    %454 = vmatpush2.msra.mxu0 0.0
    %455 = vmatprep.subr.mxu0 0.0
    %456 = vmatpush2.msra.mxu0 0.0
    %457 = vmatprep.subr.mxu0 0.0
    %458 = vmatpush2.msra.mxu0 0.0
    %459 = vmatprep.subr.mxu0 0.0
    %460 = vmatpush2.msra.mxu0 0.0
    %461 = vmatprep.subr.mxu0 0.0
    %462 = vmatpush2.msra.mxu0 0.0
    %463 = vmatprep.subr.mxu0 0.0
    %464 = vmatpush2.msra.mxu0 0.0
    %465 = vmatprep.subr.mxu0 0.0
    %466 = vmatpush2.msra.mxu0 0.0
    %467 = vmatprep.subr.mxu0 0.0
    %468 = vmatpush2.msra.mxu0 0.0
    %469 = vmatprep.subr.mxu0 0.0
    %470 = vmatpush2.msra.mxu0 0.0
    %471 = vmatprep.subr.mxu0 0.0
    %472 = vmatpush2.msra.mxu0 0.0
    %473 = vmatprep.mubr.f32.mxu0 0.0
    %474 = vmatmul.mubr.f32.gmra.mxu0 %v404
    %v475 = vpop.f32.mrf.mxu0
    %v476 = vadd.f32 0.0, %v475
    %v477 = vpop.f32.mrf.mxu0
    %478 = vmatprep.mubr.f32.mxu0 0.0
    %479 = vmatmul.mubr.f32.gmra.mxu0 %v407
    %v480 = vpop.f32.mrf.mxu0
    %v481 = vadd.f32 0.0, %v480
    %v482 = vpop.f32.mrf.mxu0
    %483 = vdwg.mxu0
    %v485 = vsel %vm402, %v400, 0
    %v488 = vsel %vm402, %v401, 0
    %490 = vmatprep.subr.mxu0 0.0
    %491 = vmatpush1.msra.mxu0 0.0
    %492 = vmatprep.subr.mxu0 0.0
    %493 = vmatpush1.msra.mxu0 0.0
    %494 = vmatprep.subr.mxu0 0.0
    %495 = vmatpush1.msra.mxu0 0.0
    %496 = vmatprep.subr.mxu0 0.0
    %497 = vmatpush1.msra.mxu0 0.0
    %498 = vmatprep.subr.mxu0 0.0
    %499 = vmatpush1.msra.mxu0 0.0
    %500 = vmatprep.subr.mxu0 0.0
    %501 = vmatpush1.msra.mxu0 0.0
    %502 = vmatprep.subr.mxu0 0.0
    %503 = vmatpush1.msra.mxu0 0.0
    %504 = vmatprep.subr.mxu0 0.0
    %505 = vmatpush1.msra.mxu0 0.0
    %506 = vmatprep.subr.mxu0 0.0
    %507 = vmatpush1.msra.mxu0 %v54
    %508 = vmatprep.subr.mxu0 0.0
    %509 = vmatpush1.msra.mxu0 %v53
    %510 = vmatprep.subr.mxu0 0.0
    %511 = vmatpush1.msra.mxu0 %v52
    %512 = vmatprep.subr.mxu0 0.0
    %513 = vmatpush1.msra.mxu0 %v51
    %514 = vmatprep.subr.mxu0 0.0
    %515 = vmatpush1.msra.mxu0 %v50
    %516 = vmatprep.subr.mxu0 0.0
    %517 = vmatpush1.msra.mxu0 %v49
    %518 = vmatprep.subr.mxu0 0.0
    %519 = vmatpush1.msra.mxu0 %v48
    %520 = vmatprep.subr.mxu0 0.0
    %521 = vmatpush1.msra.mxu0 %v47
    %522 = vmatprep.subr.mxu0 0.0
    %523 = vmatpush2.msra.mxu0 0.0
    %524 = vmatprep.subr.mxu0 0.0
    %525 = vmatpush2.msra.mxu0 0.0
    %526 = vmatprep.subr.mxu0 0.0
    %527 = vmatpush2.msra.mxu0 0.0
    %528 = vmatprep.subr.mxu0 0.0
    %529 = vmatpush2.msra.mxu0 0.0
    %530 = vmatprep.subr.mxu0 0.0
    %531 = vmatpush2.msra.mxu0 0.0
    %532 = vmatprep.subr.mxu0 0.0
    %533 = vmatpush2.msra.mxu0 0.0
    %534 = vmatprep.subr.mxu0 0.0
    %535 = vmatpush2.msra.mxu0 0.0
    %536 = vmatprep.subr.mxu0 0.0
    %537 = vmatpush2.msra.mxu0 0.0
    %538 = vmatprep.subr.mxu0 0.0
    %539 = vmatpush2.msra.mxu0 0.0
    %540 = vmatprep.subr.mxu0 0.0
    %541 = vmatpush2.msra.mxu0 0.0
    %542 = vmatprep.subr.mxu0 0.0
    %543 = vmatpush2.msra.mxu0 0.0
    %544 = vmatprep.subr.mxu0 0.0
    %545 = vmatpush2.msra.mxu0 0.0
    %546 = vmatprep.subr.mxu0 0.0
    %547 = vmatpush2.msra.mxu0 0.0
    %548 = vmatprep.subr.mxu0 0.0
    %549 = vmatpush2.msra.mxu0 0.0
    %550 = vmatprep.subr.mxu0 0.0
    %551 = vmatpush2.msra.mxu0 0.0
    %552 = vmatprep.subr.mxu0 0.0
    %553 = vmatpush2.msra.mxu0 0.0
    %554 = vmatprep.mubr.f32.mxu0 0.0
    %555 = vmatmul.mubr.f32.gmra.mxu0 %v485
    %v556 = vpop.f32.mrf.mxu0
    %v557 = vadd.f32 0.0, %v556
    %v558 = vpop.f32.mrf.mxu0
    %559 = vmatprep.mubr.f32.mxu0 0.0
    %560 = vmatmul.mubr.f32.gmra.mxu0 %v488
    %v561 = vpop.f32.mrf.mxu0
    %v562 = vadd.f32 0.0, %v561
    %v563 = vpop.f32.mrf.mxu0
    %564 = vdwg.mxu0
    %565 = vmatprep.subr.mxu0 0.0
    %566 = vmatpush1.msra.mxu0 0.0
    %567 = vmatprep.subr.mxu0 0.0
    %568 = vmatpush1.msra.mxu0 0.0
    %569 = vmatprep.subr.mxu0 0.0
    %570 = vmatpush1.msra.mxu0 0.0
    %571 = vmatprep.subr.mxu0 0.0
    %572 = vmatpush1.msra.mxu0 0.0
    %573 = vmatprep.subr.mxu0 0.0
    %574 = vmatpush1.msra.mxu0 0.0
    %575 = vmatprep.subr.mxu0 0.0
    %576 = vmatpush1.msra.mxu0 0.0
    %577 = vmatprep.subr.mxu0 0.0
    %578 = vmatpush1.msra.mxu0 0.0
    %579 = vmatprep.subr.mxu0 0.0
    %580 = vmatpush1.msra.mxu0 0.0
    %581 = vmatprep.subr.mxu0 0.0
    %582 = vmatpush1.msra.mxu0 0.0
    %583 = vmatprep.subr.mxu0 0.0
    %584 = vmatpush1.msra.mxu0 0.0
    %585 = vmatprep.subr.mxu0 0.0
    %586 = vmatpush1.msra.mxu0 0.0
    %587 = vmatprep.subr.mxu0 0.0
    %588 = vmatpush1.msra.mxu0 0.0
    %589 = vmatprep.subr.mxu0 0.0
    %590 = vmatpush1.msra.mxu0 0.0
    %591 = vmatprep.subr.mxu0 0.0
    %592 = vmatpush1.msra.mxu0 0.0
    %593 = vmatprep.subr.mxu0 0.0
    %594 = vmatpush1.msra.mxu0 %v562
    %595 = vmatprep.subr.mxu0 0.0
    %596 = vmatpush1.msra.mxu0 %v557
    %597 = vmatprep.subr.mxu0 0.0
    %598 = vmatpush2.msra.mxu0 0.0
    %599 = vmatprep.subr.mxu0 0.0
    %600 = vmatpush2.msra.mxu0 0.0
    %601 = vmatprep.subr.mxu0 0.0
    %602 = vmatpush2.msra.mxu0 0.0
    %603 = vmatprep.subr.mxu0 0.0
    %604 = vmatpush2.msra.mxu0 0.0
    %605 = vmatprep.subr.mxu0 0.0
    %606 = vmatpush2.msra.mxu0 0.0
    %607 = vmatprep.subr.mxu0 0.0
    %608 = vmatpush2.msra.mxu0 0.0
    %609 = vmatprep.subr.mxu0 0.0
    %610 = vmatpush2.msra.mxu0 0.0
    %611 = vmatprep.subr.mxu0 0.0
    %612 = vmatpush2.msra.mxu0 0.0
    %613 = vmatprep.subr.mxu0 0.0
    %614 = vmatpush2.msra.mxu0 0.0
    %615 = vmatprep.subr.mxu0 0.0
    %616 = vmatpush2.msra.mxu0 0.0
    %617 = vmatprep.subr.mxu0 0.0
    %618 = vmatpush2.msra.mxu0 0.0
    %619 = vmatprep.subr.mxu0 0.0
    %620 = vmatpush2.msra.mxu0 0.0
    %621 = vmatprep.subr.mxu0 0.0
    %622 = vmatpush2.msra.mxu0 0.0
    %623 = vmatprep.subr.mxu0 0.0
    %624 = vmatpush2.msra.mxu0 0.0
    %625 = vmatprep.subr.mxu0 0.0
    %626 = vmatpush2.msra.mxu0 0.0
    %627 = vmatprep.subr.mxu0 0.0
    %628 = vmatpush2.msra.mxu0 0.0
    %629 = vmatprep.mubr.f32.mxu0 0.0
    %630 = vmatmul.mubr.f32.gmra.mxu0 %v320
    %v631 = vpop.f32.mrf.mxu0
    %v632 = vadd.f32 0.0, %v631
    %v633 = vpop.f32.mrf.mxu0
    %634 = vmatprep.mubr.f32.mxu0 0.0
    %635 = vmatmul.mubr.f32.gmra.mxu0 %v323
    %v636 = vpop.f32.mrf.mxu0
    %v637 = vadd.f32 0.0, %v636
    %v638 = vpop.f32.mrf.mxu0
    %639 = vdwg.mxu0
    %640 = vmatprep.subr.mxu0 0.0
    %641 = vmatpush1.msra.mxu0 0.0
    %642 = vmatprep.subr.mxu0 0.0
    %643 = vmatpush1.msra.mxu0 0.0
    %644 = vmatprep.subr.mxu0 0.0
    %645 = vmatpush1.msra.mxu0 0.0
    %646 = vmatprep.subr.mxu0 0.0
    %647 = vmatpush1.msra.mxu0 0.0
    %648 = vmatprep.subr.mxu0 0.0
    %649 = vmatpush1.msra.mxu0 0.0
    %650 = vmatprep.subr.mxu0 0.0
    %651 = vmatpush1.msra.mxu0 0.0
    %652 = vmatprep.subr.mxu0 0.0
    %653 = vmatpush1.msra.mxu0 0.0
    %654 = vmatprep.subr.mxu0 0.0
    %655 = vmatpush1.msra.mxu0 0.0
    %656 = vmatprep.subr.mxu0 0.0
    %657 = vmatpush1.msra.mxu0 0.0
    %658 = vmatprep.subr.mxu0 0.0
    %659 = vmatpush1.msra.mxu0 0.0
    %660 = vmatprep.subr.mxu0 0.0
    %661 = vmatpush1.msra.mxu0 0.0
    %662 = vmatprep.subr.mxu0 0.0
    %663 = vmatpush1.msra.mxu0 0.0
    %664 = vmatprep.subr.mxu0 0.0
    %665 = vmatpush1.msra.mxu0 0.0
    %666 = vmatprep.subr.mxu0 0.0
    %667 = vmatpush1.msra.mxu0 0.0
    %668 = vmatprep.subr.mxu0 0.0
    %669 = vmatpush1.msra.mxu0 %v481
    %670 = vmatprep.subr.mxu0 0.0
    %671 = vmatpush1.msra.mxu0 %v476
    %672 = vmatprep.subr.mxu0 0.0
    %673 = vmatpush2.msra.mxu0 0.0
    %674 = vmatprep.subr.mxu0 0.0
    %675 = vmatpush2.msra.mxu0 0.0
    %676 = vmatprep.subr.mxu0 0.0
    %677 = vmatpush2.msra.mxu0 0.0
    %678 = vmatprep.subr.mxu0 0.0
    %679 = vmatpush2.msra.mxu0 0.0
    %680 = vmatprep.subr.mxu0 0.0
    %681 = vmatpush2.msra.mxu0 0.0
    %682 = vmatprep.subr.mxu0 0.0
    %683 = vmatpush2.msra.mxu0 0.0
    %684 = vmatprep.subr.mxu0 0.0
    %685 = vmatpush2.msra.mxu0 0.0
    %686 = vmatprep.subr.mxu0 0.0
    %687 = vmatpush2.msra.mxu0 0.0
    %688 = vmatprep.subr.mxu0 0.0
    %689 = vmatpush2.msra.mxu0 0.0
    %690 = vmatprep.subr.mxu0 0.0
    %691 = vmatpush2.msra.mxu0 0.0
    %692 = vmatprep.subr.mxu0 0.0
    %693 = vmatpush2.msra.mxu0 0.0
    %694 = vmatprep.subr.mxu0 0.0
    %695 = vmatpush2.msra.mxu0 0.0
    %696 = vmatprep.subr.mxu0 0.0
    %697 = vmatpush2.msra.mxu0 0.0
    %698 = vmatprep.subr.mxu0 0.0
    %699 = vmatpush2.msra.mxu0 0.0
    %700 = vmatprep.subr.mxu0 0.0
    %701 = vmatpush2.msra.mxu0 0.0
    %702 = vmatprep.subr.mxu0 0.0
    %703 = vmatpush2.msra.mxu0 0.0
    %704 = vmatprep.mubr.f32.mxu0 0.0
    %705 = vmatmul.mubr.f32.gmra.mxu0 %v158
    %v706 = vpop.f32.mrf.mxu0
    %v707 = vadd.f32 %v632, %v706
    %v708 = vpop.f32.mrf.mxu0
    %709 = vmatprep.mubr.f32.mxu0 0.0
    %710 = vmatmul.mubr.f32.gmra.mxu0 %v161
    %v711 = vpop.f32.mrf.mxu0
    %v712 = vadd.f32 %v637, %v711
    %v713 = vpop.f32.mrf.mxu0
    %714 = vdwg.mxu0
    %v715 = vlaneseq
    %v716 = vshrl.u32 %v715, 7
    %v717 = vsub.s32 0, %v716
    %v718 = vrot.slane %v65, %v717
    %v719 = vadd.f32 %v707, %v718
    %v720 = vadd.f32 %v712, %v718
    %v721 = vsel %vm70, %v719, 0.0
    %722 = vadd.xlane.f32.xlu0 %v721
    %v723 = vpop.xlane.xlu0 %722
    %v724 = vsel %vm70, %v720, 0.0
    %725 = vadd.xlane.f32.xlu0 %v724
    %v726 = vpop.xlane.xlu0 %725
    %v727 = vrcp.pop 32.0
    %v728 = vmul.f32 %v723, %v727
    %v729 = vmul.f32 %v726, %v727
    %v730 = vsub.f32 %v719, %v728
    %v731 = vsub.f32 %v720, %v729
    %v732 = vmul.f32 %v730, %v730
    %v733 = vmul.f32 %v731, %v731
    %v734 = vsel %vm70, %v732, 0.0
    %735 = vadd.xlane.f32.xlu0 %v734
    %v736 = vpop.xlane.xlu0 %735
    %v737 = vsel %vm70, %v733, 0.0
    %738 = vadd.xlane.f32.xlu0 %v737
    %v739 = vpop.xlane.xlu0 %738
    %v740 = vrcp.pop 31.0
    %v741 = vmul.f32 %v736, %v740
    %v742 = vmul.f32 %v739, %v740
    %v743 = vrsqrt.pop %v741
    %v744 = vmul.f32 %v741, %v743
    %vm745 = vcmp.eq.f32.partialorder %v741, inf
    %v746 = vsel %vm745, %v741, %v744
    %vm747 = vcmp.eq.f32.partialorder %v741, 0.0
    %v748 = vand.u32 %v741, 2147483648
    %v749 = vsel %vm747, %v748, %v746
    %v750 = vrsqrt.pop %v742
    %v751 = vmul.f32 %v742, %v750
    %vm752 = vcmp.eq.f32.partialorder %v742, inf
    %v753 = vsel %vm752, %v742, %v751
    %vm754 = vcmp.eq.f32.partialorder %v742, 0.0
    %v755 = vand.u32 %v742, 2147483648
    %v756 = vsel %vm754, %v755, %v753
    %v757 = vadd.f32 %v749, 1e-06
    %v758 = vadd.f32 %v756, 1e-06
    %v759 = vrcp.pop %v757
    %v760 = vrcp.pop %v758
    %v761 = vlaneseq
    %v762 = vshrl.u32 %v761, 7
    %v763 = vsub.s32 0, %v762
    %v764 = vrot.slane %v66, %v763
    %v765 = vmul.f32 %v764, %v730
    %v766 = vmul.f32 %v764, %v731
    %v767 = vmul.f32 %v765, %v759
    %v768 = vmul.f32 %v766, %v760
    %v769 = vlaneseq
    %v770 = vshrl.u32 %v769, 7
    %v771 = vsub.s32 0, %v770
    %v772 = vrot.slane %v67, %v771
    %v773 = vadd.f32 %v767, %v772
    %v774 = vadd.f32 %v768, %v772
    %v775 = vadd.f32 %v773, %v24
    %v776 = vadd.f32 %v774, %v25
    %v777 = vlaneseq
    %v778 = vshrl.u32 %v777, 7
    %v779 = vsub.s32 0, %v778
    %v780 = vrot.slane %v68, %v779
    %v782 = vsel %vm70, %v775, 0
    %v785 = vsel %vm70, %v776, 0
    %787 = vmatprep.subr.mxu0 0.0
    %788 = vmatpush1.msra.mxu0 0.0
    %789 = vmatprep.subr.mxu0 0.0
    %790 = vmatpush1.msra.mxu0 0.0
    %791 = vmatprep.subr.mxu0 0.0
    %792 = vmatpush1.msra.mxu0 0.0
    %793 = vmatprep.subr.mxu0 0.0
    %794 = vmatpush1.msra.mxu0 0.0
    %795 = vmatprep.subr.mxu0 0.0
    %796 = vmatpush1.msra.mxu0 0.0
    %797 = vmatprep.subr.mxu0 0.0
    %798 = vmatpush1.msra.mxu0 0.0
    %799 = vmatprep.subr.mxu0 0.0
    %800 = vmatpush1.msra.mxu0 0.0
    %801 = vmatprep.subr.mxu0 0.0
    %802 = vmatpush1.msra.mxu0 0.0
    %803 = vmatprep.subr.mxu0 0.0
    %804 = vmatpush1.msra.mxu0 0.0
    %805 = vmatprep.subr.mxu0 0.0
    %806 = vmatpush1.msra.mxu0 0.0
    %807 = vmatprep.subr.mxu0 0.0
    %808 = vmatpush1.msra.mxu0 0.0
    %809 = vmatprep.subr.mxu0 0.0
    %810 = vmatpush1.msra.mxu0 0.0
    %811 = vmatprep.subr.mxu0 0.0
    %812 = vmatpush1.msra.mxu0 %v58
    %813 = vmatprep.subr.mxu0 0.0
    %814 = vmatpush1.msra.mxu0 %v57
    %815 = vmatprep.subr.mxu0 0.0
    %816 = vmatpush1.msra.mxu0 %v56
    %817 = vmatprep.subr.mxu0 0.0
    %818 = vmatpush1.msra.mxu0 %v55
    %819 = vmatprep.subr.mxu0 0.0
    %820 = vmatpush2.msra.mxu0 0.0
    %821 = vmatprep.subr.mxu0 0.0
    %822 = vmatpush2.msra.mxu0 0.0
    %823 = vmatprep.subr.mxu0 0.0
    %824 = vmatpush2.msra.mxu0 0.0
    %825 = vmatprep.subr.mxu0 0.0
    %826 = vmatpush2.msra.mxu0 0.0
    %827 = vmatprep.subr.mxu0 0.0
    %828 = vmatpush2.msra.mxu0 0.0
    %829 = vmatprep.subr.mxu0 0.0
    %830 = vmatpush2.msra.mxu0 0.0
    %831 = vmatprep.subr.mxu0 0.0
    %832 = vmatpush2.msra.mxu0 0.0
    %833 = vmatprep.subr.mxu0 0.0
    %834 = vmatpush2.msra.mxu0 0.0
    %835 = vmatprep.subr.mxu0 0.0
    %836 = vmatpush2.msra.mxu0 0.0
    %837 = vmatprep.subr.mxu0 0.0
    %838 = vmatpush2.msra.mxu0 0.0
    %839 = vmatprep.subr.mxu0 0.0
    %840 = vmatpush2.msra.mxu0 0.0
    %841 = vmatprep.subr.mxu0 0.0
    %842 = vmatpush2.msra.mxu0 0.0
    %843 = vmatprep.subr.mxu0 0.0
    %844 = vmatpush2.msra.mxu0 0.0
    %845 = vmatprep.subr.mxu0 0.0
    %846 = vmatpush2.msra.mxu0 0.0
    %847 = vmatprep.subr.mxu0 0.0
    %848 = vmatpush2.msra.mxu0 0.0
    %849 = vmatprep.subr.mxu0 0.0
    %850 = vmatpush2.msra.mxu0 0.0
    %851 = vmatprep.mubr.f32.mxu0 0.0
    %852 = vmatmul.mubr.f32.gmra.mxu0 %v782
    %v853 = vpop.f32.mrf.mxu0
    %v854 = vadd.f32 %v780, %v853
    %v855 = vpop.f32.mrf.mxu0
    %856 = vmatprep.mubr.f32.mxu0 0.0
    %857 = vmatmul.mubr.f32.gmra.mxu0 %v785
    %v858 = vpop.f32.mrf.mxu0
    %v859 = vadd.f32 %v780, %v858
    %v860 = vpop.f32.mrf.mxu0
    %861 = vdwg.mxu0
    %v862 = vmax.f32 %v854, 0.0
    %v863 = vmax.f32 %v859, 0.0
    %v864 = vlaneseq
    %v865 = vshrl.u32 %v864, 7
    %v866 = vsub.s32 0, %v865
    %v867 = vrot.slane %v69, %v866
    %v869 = vsel %vm70, %v862, 0
    %v872 = vsel %vm70, %v863, 0
    %874 = vmatprep.subr.mxu0 0.0
    %875 = vmatpush1.msra.mxu0 0.0
    %876 = vmatprep.subr.mxu0 0.0
    %877 = vmatpush1.msra.mxu0 0.0
    %878 = vmatprep.subr.mxu0 0.0
    %879 = vmatpush1.msra.mxu0 0.0
    %880 = vmatprep.subr.mxu0 0.0
    %881 = vmatpush1.msra.mxu0 0.0
    %882 = vmatprep.subr.mxu0 0.0
    %883 = vmatpush1.msra.mxu0 0.0
    %884 = vmatprep.subr.mxu0 0.0
    %885 = vmatpush1.msra.mxu0 0.0
    %886 = vmatprep.subr.mxu0 0.0
    %887 = vmatpush1.msra.mxu0 0.0
    %888 = vmatprep.subr.mxu0 0.0
    %889 = vmatpush1.msra.mxu0 0.0
    %890 = vmatprep.subr.mxu0 0.0
    %891 = vmatpush1.msra.mxu0 0.0
    %892 = vmatprep.subr.mxu0 0.0
    %893 = vmatpush1.msra.mxu0 0.0
    %894 = vmatprep.subr.mxu0 0.0
    %895 = vmatpush1.msra.mxu0 0.0
    %896 = vmatprep.subr.mxu0 0.0
    %897 = vmatpush1.msra.mxu0 0.0
    %898 = vmatprep.subr.mxu0 0.0
    %899 = vmatpush1.msra.mxu0 %v62
    %900 = vmatprep.subr.mxu0 0.0
    %901 = vmatpush1.msra.mxu0 %v61
    %902 = vmatprep.subr.mxu0 0.0
    %903 = vmatpush1.msra.mxu0 %v60
    %904 = vmatprep.subr.mxu0 0.0
    %905 = vmatpush1.msra.mxu0 %v59
    %906 = vmatprep.subr.mxu0 0.0
    %907 = vmatpush2.msra.mxu0 0.0
    %908 = vmatprep.subr.mxu0 0.0
    %909 = vmatpush2.msra.mxu0 0.0
    %910 = vmatprep.subr.mxu0 0.0
    %911 = vmatpush2.msra.mxu0 0.0
    %912 = vmatprep.subr.mxu0 0.0
    %913 = vmatpush2.msra.mxu0 0.0
    %914 = vmatprep.subr.mxu0 0.0
    %915 = vmatpush2.msra.mxu0 0.0
    %916 = vmatprep.subr.mxu0 0.0
    %917 = vmatpush2.msra.mxu0 0.0
    %918 = vmatprep.subr.mxu0 0.0
    %919 = vmatpush2.msra.mxu0 0.0
    %920 = vmatprep.subr.mxu0 0.0
    %921 = vmatpush2.msra.mxu0 0.0
    %922 = vmatprep.subr.mxu0 0.0
    %923 = vmatpush2.msra.mxu0 0.0
    %924 = vmatprep.subr.mxu0 0.0
    %925 = vmatpush2.msra.mxu0 0.0
    %926 = vmatprep.subr.mxu0 0.0
    %927 = vmatpush2.msra.mxu0 0.0
    %928 = vmatprep.subr.mxu0 0.0
    %929 = vmatpush2.msra.mxu0 0.0
    %930 = vmatprep.subr.mxu0 0.0
    %931 = vmatpush2.msra.mxu0 0.0
    %932 = vmatprep.subr.mxu0 0.0
    %933 = vmatpush2.msra.mxu0 0.0
    %934 = vmatprep.subr.mxu0 0.0
    %935 = vmatpush2.msra.mxu0 0.0
    %936 = vmatprep.subr.mxu0 0.0
    %937 = vmatpush2.msra.mxu0 0.0
    %938 = vmatprep.mubr.f32.mxu0 0.0
    %939 = vmatmul.mubr.f32.gmra.mxu0 %v869
    %v940 = vpop.f32.mrf.mxu0
    %v941 = vadd.f32 %v867, %v940
    %v942 = vpop.f32.mrf.mxu0
    %943 = vmatprep.mubr.f32.mxu0 0.0
    %944 = vmatmul.mubr.f32.gmra.mxu0 %v872
    %v945 = vpop.f32.mrf.mxu0
    %v946 = vadd.f32 %v867, %v945
    %v947 = vpop.f32.mrf.mxu0
    %948 = vdwg.mxu0
    %v949 = vadd.f32 %v941, %v775
    %v950 = vadd.f32 %v946, %v776
    %951 = vst.msk [vmem:[#allocation2] sm:$0xff] %vm70, %v949
    %952 = vst.msk [vmem:[#allocation2 + $0x8] sm:$0xff] %vm70, %v950
    // Predicated region
    $region26: #{graph_module_forward.1} parent=1 // pred_check
      _
    $region27: #{graph_module_forward.1} parent=1 // pred_check_branch
      %954 = sbr.rel (0) target = $region29
    $region28: #{graph_module_forward.1} parent=1 // pred_region
      %s956 = ssub.s32 256, 256
      %957 = vsyncadd [#allocation3], %s956
      %s958 = sshll.u32 [#allocation2], 4
      %s959 = int_to_ptr.vmem [resolvable:$true] %s958
      %964 = dma.vmem_to_hbm [thread:$0]  %s959, 256, %s6, [#allocation3], 128, 128, 8
    $region29: #{graph_module_forward.1} parent=1 // pred_fallthru
      _
    // Predicated region
    $region30: #{graph_module_forward.1} parent=1 // pred_check
      _
    $region31: #{graph_module_forward.1} parent=1 // pred_check_branch
      %966 = sbr.rel (0) target = $region33
    $region32: #{graph_module_forward.1} parent=1 // pred_region
      %967 = dma.done [#allocation3], 256
    $region33: #{graph_module_forward.1} parent=1 // pred_fallthru
      _
    %968 = vsyncpa [#allocation3], 1

</llo_original>
